<compile_context>
chip_gen: v7x
topology: tpu7x:2x2x1
jax: 0.10.0
libtpu: 0.0.40
codegen_flags: <defaults>
</compile_context>

<pallas_src>
import math

import jax
import jax.numpy as jnp
from jax.experimental import pallas as pl
from jax.experimental.pallas import tpu as pltpu

_LANE_WIDTH = 1024   # lane-dense last dim: large multiple of 128
_TILE_ROWS = 512     # multiple of 8 sublanes; 512*1024*4B = 2 MiB per f32 block


def _identity_kernel(x_ref, o_ref):
    # Pure pass-through of the current tile.
    o_ref[...] = x_ref[...]


def _identity_copy_2d(x2d):
    """Tiled, lane-dense VMEM copy of a (R, 1024) array."""
    R, C = x2d.shape
    tile_r = R if R <= _TILE_ROWS else _TILE_ROWS  # full dim or multiple of 8
    grid = (pl.cdiv(R, tile_r),)
    return pl.pallas_call(
        _identity_kernel,
        out_shape=jax.ShapeDtypeStruct((R, C), x2d.dtype),
        grid=grid,
        in_specs=[pl.BlockSpec((tile_r, C), lambda i: (i, 0))],
        out_specs=pl.BlockSpec((tile_r, C), lambda i: (i, 0)),
        input_output_aliases={0: 0},
        compiler_params=pltpu.CompilerParams(
            dimension_semantics=("parallel",),
        ),
    )(x2d)


@jax.jit
def empty_module_forward(x):
    """Identity forward pass (EmptyModule).

    Semantically this is just `return x`; the Pallas kernel below is the
    optimized physical pass-through requested by the perf review (lane-dense,
    row-tiled, in/out aliased).
    """
    orig_shape = x.shape
    orig_dtype = x.dtype
    total = math.prod(orig_shape) if len(orig_shape) > 0 else 1

    # Flatten and pad to a lane-dense 2D view: last dim = 1024 (8 x 128 lanes).
    flat = x.reshape(total)
    padded_total = ((total + _LANE_WIDTH - 1) // _LANE_WIDTH) * _LANE_WIDTH
    if padded_total != total:
        flat = jnp.pad(flat, (0, padded_total - total))
    x2d = flat.reshape(padded_total // _LANE_WIDTH, _LANE_WIDTH)

    out2d = _identity_copy_2d(x2d)

    out = out2d.reshape(padded_total)[:total].reshape(orig_shape)
    return out.astype(orig_dtype)


if __name__ == "__main__":
    key = jax.random.PRNGKey(0)
    # NCHW input, small shape consistent with a darknet-style feature map.
    x = jax.random.normal(key, (2, 4, 16, 16), dtype=jnp.float32)

    y = empty_module_forward(x)
    jax.block_until_ready(y)

    assert y.shape == x.shape and y.dtype == x.dtype
    assert bool(jnp.all(y == x))
    print("KERNEL_OK")
</pallas_src>

<mosaic_0001>
module attributes {stable_mosaic.version = 11 : i64} {
  func.func @_identity_kernel(%arg0: i32, %arg1: memref<2x1024xf32, #tpu.memory_space<vmem>>, %arg2: memref<2x1024xf32, #tpu.memory_space<vmem>>) attributes {dimension_semantics = [#tpu.dimension_semantics<parallel>], iteration_bounds = array<i64: 1>, scalar_prefetch = 0 : i64, scratch_operands = 0 : i64, tpu.core_type = #tpu.core_type<tc>, window_params = [{transform_indices = @transform_0, window_bounds = array<i64: 2, 1024>}, {transform_indices = @transform_1, window_bounds = array<i64: 2, 1024>}]} {
    %c0 = arith.constant 0 : index
    %c0_0 = arith.constant 0 : index
    %0 = vector.load %arg1[%c0, %c0_0] : memref<2x1024xf32, #tpu.memory_space<vmem>>, vector<2x1024xf32>
    %c0_1 = arith.constant 0 : index
    %c0_2 = arith.constant 0 : index
    %1 = vector.load %arg2[%c0_1, %c0_2] : memref<2x1024xf32, #tpu.memory_space<vmem>>, vector<2x1024xf32>
    tpu.vector_store %arg2[%c0_1, %c0_2], %0 {strides = array<i32>} : memref<2x1024xf32, #tpu.memory_space<vmem>>, vector<2x1024xf32>,
    return
  }
  func.func @transform_0(%arg0: i32) -> (i32, i32) {
    %c0_i32 = arith.constant 0 : i32
    %c0_i32_0 = arith.constant 0 : i32
    return %arg0, %c0_i32 : i32, i32
  }
  func.func @transform_1(%arg0: i32) -> (i32, i32) {
    %c0_i32 = arith.constant 0 : i32
    %c0_i32_0 = arith.constant 0 : i32
    return %arg0, %c0_i32 : i32, i32
  }
}

</mosaic_0001>

<llo_original>
// kernel: empty_module_forward.1
$region0: #{empty_module_forward.1}
  #allocation0 [shape = 'u32[]', space=smem, size = 0x4, offset = 0x4, fixed_abs, tag = 'smem constant byte address 0x4 - core index']
  #allocation1 [shape = 'u32[144,128]{1,0:T(1,128)}', space=vmem, size = 0x12000, scoped, tag = 'internal scratch']
  %s0 = inlined_call_operand.vmem [shape: f32[2,1024], index: 0, kind: input, shape index: {}, may-alias: {0,1}]
  %s1 = inlined_call_operand.vmem [shape: f32[2,1024], index: 1, kind: output, shape index: {}, may-alias: {0,1}]
  %s2 = sld [smem:[#allocation0]]
  $region14: #{empty_module_forward.1} parent=0
    _
  %s4 = ssub.s32 1, %s2
  %s5 = scalar_select 0, %s4, %s2
  // Predicated region
  $region2: #{empty_module_forward.1} parent=0 // pred_check
    _
  $region3: #{empty_module_forward.1} parent=0 // pred_check_branch
    %7 = sbr.rel (0) target = $region5
  $region4: #{empty_module_forward.1} parent=0 // pred_region
    _
  $region5: #{empty_module_forward.1} parent=0 // pred_fallthru
    _
  %v8 = vld [vmem:[%s0] sm:$0xff]
  %v9 = vld [vmem:[%s0 + $0x8] sm:$0xff]
  %10 = vst [vmem:[%s1] sm:$0xff] %v8
  %11 = vst [vmem:[%s1 + $0x8] sm:$0xff] %v9
  // Predicated region
  $region6: #{empty_module_forward.1} parent=0 // pred_check
    _
  $region7: #{empty_module_forward.1} parent=0 // pred_check_branch
    %13 = sbr.rel (0) target = $region9
  $region8: #{empty_module_forward.1} parent=0 // pred_region
    _
  $region9: #{empty_module_forward.1} parent=0 // pred_fallthru
    _
  // Predicated region
  $region10: #{empty_module_forward.1} parent=0 // pred_check
    _
  $region11: #{empty_module_forward.1} parent=0 // pred_check_branch
    %15 = sbr.rel (0) target = $region13
  $region12: #{empty_module_forward.1} parent=0 // pred_region
    _
  $region13: #{empty_module_forward.1} parent=0 // pred_fallthru
    _

</llo_original>
